<compile_context>
chip_gen: v7x
topology: tpu7x:2x2x1
jax: 0.10.0
libtpu: 0.0.40
codegen_flags: <defaults>
</compile_context>

<pallas_src>
import jax
import jax.numpy as jnp
from jax import lax
from jax.experimental import pallas as pl
from jax.experimental.pallas import tpu as pltpu


def calc_ind(s, e):
    if s == 0:
        start_ind = 0
    else:
        start_ind = 4 * (s - 1) * (s - 1) + 4 * (s - 1) + 1
    end_ind = 4 * e * e + 4 * e + 1
    return (start_ind, end_ind, end_ind - start_ind)


LANE = 128                   # lane width: pixel axis is the last (lane) dim
CHUNK_COLS = 2048            # in-kernel lane sub-tile (512-2048 keeps h small)
MAX_TILE_COLS = 128 * 1024   # pixel columns per grid step (amortize step cost)
MIN_GRID_STEPS = 4           # never collapse the grid (v7x: 2 TCs + pipelining)


def _vmem_budget_bytes():
    """Generation-aware VMEM budget (v7x: ~48 MiB of 64; v5e/v6e: ~96 of 128)."""
    phys = 64 * 1024 * 1024                     # conservative fallback (v7x)
    try:
        info = pltpu.get_tpu_info()
        phys = int(getattr(info, "vmem_capacity_bytes", phys)) or phys
    except Exception:
        pass
    return max(32 * 1024 * 1024, min((phys * 3) // 4, 96 * 1024 * 1024))


# ----------------------------- Pallas kernel --------------------------------

def _make_kernel(two_layer, c, has_skip, fuse_render, tile_px, chunk):
    """1x1-conv stack (+ReLU) [+ group-sum render + skip], lane-chunked."""
    n_full = tile_px // chunk
    rem = tile_px - n_full * chunk

    def kernel(*refs):
        if two_layer:
            x_ref, w1_ref, b1_ref, w2_ref, b2_ref = refs[:5]
            rest = refs[5:]
        else:
            x_ref, w1_ref, b1_ref = refs[:3]
            w2_ref = b2_ref = None
            rest = refs[3:]
        skip_ref = rest[0] if has_skip else None
        o_ref = rest[-1]

        # Weights / biases are tiny and grid-invariant: load once per step,
        # outside the lane-chunk loop.
        w1 = w1_ref[...]                           # (C1, Cin), MXU dtype
        b1 = b1_ref[...].astype(jnp.float32)       # (C1, 1)
        if two_layer:
            w2 = w2_ref[...]                       # (ccc, ccc)
            b2 = b2_ref[...].astype(jnp.float32)   # (ccc, 1)
        mxu_dt = w1.dtype

        def do_chunk(off, size):
            x = x_ref[0, :, pl.ds(off, size)].astype(mxu_dt)       # (Cin, size)
            # TODO(synk): for tiny Cin (K<=8) a VPU broadcast-FMA layer-1 may
            # beat the padded-K MXU pass; only worth it if a bundle dump shows
            # the MXU binding (this kernel is HBM-bound at these channel sizes).
            h = jnp.dot(w1, x, preferred_element_type=jnp.float32)
            h = jnp.maximum(h + b1, 0.0)                            # (C1, size)
            if two_layer:
                h = jnp.dot(w2, h.astype(mxu_dt),
                            preferred_element_type=jnp.float32)
                h = jnp.maximum(h + b2, 0.0)                        # (ccc, size)
            if fuse_render:
                if two_layer:
                    # Stand-in render epilogue: per-RGB coefficient group sum.
                    # reshape-sum = XLU sublane reduce (no slice+concat buffer).
                    rgb = h.reshape(3, c, size).sum(axis=1)         # (3, size)
                else:
                    rgb = h                                         # c == 1
                if has_skip:
                    rgb = rgb + skip_ref[0, :, pl.ds(off, size)].astype(
                        jnp.float32)
                o_ref[0, :, pl.ds(off, size)] = rgb.astype(o_ref.dtype)
            else:
                o_ref[0, :, pl.ds(off, size)] = h.astype(o_ref.dtype)

        if n_full == 1:
            do_chunk(0, chunk)
        elif n_full > 1:
            def body(i, carry):
                do_chunk(pl.multiple_of(i * chunk, chunk), chunk)
                return carry
            lax.fori_loop(0, n_full, body, 0, unroll=(n_full <= 8))
        if rem > 0:
            do_chunk(n_full * chunk, rem)

    return kernel


# ------------------------------ wrapper --------------------------------------

def _run_pallas(feature, params, block_id, c, *, skip=None, fuse_render=True,
                mxu_dtype=jnp.bfloat16, tile_px=None, chunk_cols=CHUNK_COLS):
    """Runs the Render_block conv stack (optionally fused with render+skip)."""
    B, Cin, H, W = feature.shape
    P = H * W
    two_layer = block_id != 0
    ccc = 3 * c if two_layer else 3
    cout = 3 if fuse_render else ccc
    has_skip = fuse_render and (skip is not None)
    out_dtype = feature.dtype
    esz = lambda dt: jnp.dtype(dt).itemsize

    x = feature.reshape(B, Cin, P)          # free reshape: pixels on lane axis

    # ---------------- generation-aware tile sizing ---------------------------
    budget = _vmem_budget_bytes()
    if tile_px is None:
        # Double-buffered DMA blocks dominate VMEM; compute intermediates are
        # chunk-sized and independent of tile_px after in-kernel chunking.
        per_col = 2 * (Cin * esz(x.dtype) + cout * esz(out_dtype))
        if has_skip:
            per_col += 2 * 3 * esz(skip.dtype)
        fixed = 2 * 1024 * 1024             # weights + chunk temps + slack
        tile_px = (budget - fixed) // per_col
        tile_px = max(LANE, min(tile_px, MAX_TILE_COLS))
        # Never collapse the grid below MIN_GRID_STEPS total steps (keeps both
        # v7x TensorCores fed and the DMA pipeline rolling).
        need_tiles = -(-MIN_GRID_STEPS // B)          # ceil(MIN_GRID_STEPS/B)
        if need_tiles > 1:
            cap = ((P // need_tiles) // LANE) * LANE
            if cap >= LANE:
                tile_px = min(tile_px, cap)
        tile_px = (tile_px // LANE) * LANE

    if tile_px >= P:
        tile_px = P                          # full-extent lane block: any size
        chunk = min(chunk_cols, P)
    elif tile_px > chunk_cols:
        tile_px = (tile_px // chunk_cols) * chunk_cols
        chunk = chunk_cols
    else:
        chunk = tile_px
    n_tiles = pl.cdiv(P, tile_px)            # Pallas masks the tail block

    # ---------------- operands & specs ---------------------------------------
    if two_layer:
        w1, b1, w2, b2 = params
        args = [x,
                w1.astype(mxu_dtype), b1.reshape(ccc, 1).astype(jnp.float32),
                w2.astype(mxu_dtype), b2.reshape(ccc, 1).astype(jnp.float32)]
        in_specs = [
            pl.BlockSpec((1, Cin, tile_px), lambda b, p: (b, 0, p)),
            pl.BlockSpec((ccc, Cin), lambda b, p: (0, 0)),
            pl.BlockSpec((ccc, 1), lambda b, p: (0, 0)),
            pl.BlockSpec((ccc, ccc), lambda b, p: (0, 0)),
            pl.BlockSpec((ccc, 1), lambda b, p: (0, 0)),
        ]
    else:
        w1, b1 = params
        args = [x, w1.astype(mxu_dtype), b1.reshape(3, 1).astype(jnp.float32)]
        in_specs = [
            pl.BlockSpec((1, Cin, tile_px), lambda b, p: (b, 0, p)),
            pl.BlockSpec((3, Cin), lambda b, p: (0, 0)),
            pl.BlockSpec((3, 1), lambda b, p: (0, 0)),
        ]
    if has_skip:
        args.append(skip.reshape(B, 3, P))
        in_specs.append(pl.BlockSpec((1, 3, tile_px), lambda b, p: (b, 0, p)))

    kernel = _make_kernel(two_layer, c, has_skip, fuse_render, tile_px, chunk)

    out = pl.pallas_call(
        kernel,
        out_shape=jax.ShapeDtypeStruct((B, cout, P), out_dtype),
        grid=(B, n_tiles),
        in_specs=in_specs,
        out_specs=pl.BlockSpec((1, cout, tile_px), lambda b, p: (b, 0, p)),
        compiler_params=pltpu.CompilerParams(
            dimension_semantics=("parallel", "parallel"),
            vmem_limit_bytes=int(budget)),
    )(*args)
    return out.reshape(B, cout, H, W)


def default_render(feature_extract, h, w, s, e, bsize):
    # TODO(synk): stand-in for Fourier_render_patch — the real render performs
    # a coordinate-dependent Fourier reconstruction (grid_sample + per-pixel
    # basis) and upsamples to (h, w); this stand-in sums each RGB coefficient
    # group at the feature-map resolution (matches the fused kernel epilogue).
    B, C3, H, W = feature_extract.shape
    c = C3 // 3
    return feature_extract.reshape(B, 3, c, H, W).sum(axis=2)


class RenderBlockPallas:
    """JAX/Pallas port of Render_block (feature -> tmp RGB).

    render=None     -> conv stack + group-sum render + skip fused in one kernel.
    render=callable -> conv-stack-only kernel, render/skip in plain JAX.
    mxu_dtype       -> matmul operand dtype (bf16 is MXU-native on v6e/v7x;
                       use jnp.float32 for exact-f32 dots).
    """

    def __init__(self, block_id, in_channels, render=None, key=None,
                 mxu_dtype=jnp.bfloat16):
        self.block_id = block_id
        self.in_channels = in_channels
        self.s_ind, self.e_ind, self.c = calc_ind(s=block_id, e=block_id)
        self.ccc = self.c * 3
        self.render = render
        self.mxu_dtype = mxu_dtype
        if key is None:
            key = jax.random.PRNGKey(0)

        def _init_conv1x1(k, fan_in, fan_out):
            kw, kb = jax.random.split(k)
            bound = 1.0 / float(fan_in) ** 0.5
            # Stored as (Cout, Cin): a PyTorch Conv2d 1x1 weight (Cout, Cin, 1, 1)
            # maps here via .reshape(Cout, Cin) — no transpose needed.
            w = jax.random.uniform(kw, (fan_out, fan_in), jnp.float32,
                                   minval=-bound, maxval=bound)
            b = jax.random.uniform(kb, (fan_out,), jnp.float32,
                                   minval=-bound, maxval=bound)
            return w, b

        if self.block_id != 0:
            k1, k2 = jax.random.split(key)
            w1, b1 = _init_conv1x1(k1, in_channels, self.ccc)
            w2, b2 = _init_conv1x1(k2, self.ccc, self.ccc)
            self.params = (w1, b1, w2, b2)
        else:
            w1, b1 = _init_conv1x1(key, in_channels, 3)
            self.params = (w1, b1)

    def __call__(self, feature, h, w, bsize, skip=None):
        if self.render is None:
            # Fused: conv stack + group-sum render + skip in one kernel pass
            # (output writeback shrinks ccc -> 3 channels).
            return _run_pallas(feature, self.params, self.block_id, self.c,
                               skip=skip, fuse_render=True,
                               mxu_dtype=self.mxu_dtype)
        # Unfused custom-render path.  TODO(synk): the (B, ccc, P) intermediate
        # writeback is 8-24x the fused HBM traffic; fuse the linear part of the
        # custom render (or emit the intermediate in bf16) if this path matters.
        feature_extract = _run_pallas(feature, self.params, self.block_id,
                                      self.c, skip=None, fuse_render=False,
                                      mxu_dtype=self.mxu_dtype)
        out = self.render(feature_extract, h=h, w=w,
                          s=self.block_id, e=self.block_id, bsize=bsize)
        return out if skip is None else out + skip


# --------------------------- pure-JAX reference ------------------------------

def _ref_forward(feature, params, block_id, c, skip, mxu_dtype=jnp.bfloat16):
    """Reference mirroring the kernel's cast points exactly (dot operands in
    mxu_dtype, f32 accumulation / bias / ReLU / group-sum / skip), so the
    allclose check can be tight.  With mxu_dtype=float32 it is the plain f32
    einsum reference."""
    f32 = jnp.float32

    def conv1x1(w, x_bchw):
        return jnp.einsum('oc,bchw->bohw', w.astype(mxu_dtype),
                          x_bchw.astype(mxu_dtype),
                          preferred_element_type=f32)

    xf = feature.astype(f32)
    if block_id != 0:
        w1, b1, w2, b2 = params
        h = jax.nn.relu(conv1x1(w1, xf) + b1[None, :, None, None])
        h = jax.nn.relu(conv1x1(w2, h) + b2[None, :, None, None])
        B, _, H, W = h.shape
        rgb = h.reshape(B, 3, c, H, W).sum(axis=2)
    else:
        w1, b1 = params
        rgb = jax.nn.relu(conv1x1(w1, xf) + b1[None, :, None, None])
    if skip is not None:
        rgb = rgb + skip.astype(f32)
    return rgb.astype(feature.dtype)


# --------------------------------- demo --------------------------------------

if __name__ == "__main__":
    key = jax.random.PRNGKey(0)
    k_feat, k_skip, k_p0, k_p1, k_big = jax.random.split(key, 5)

    B, Cin, H, W = 2, 4, 16, 16
    feature = jax.random.normal(k_feat, (B, Cin, H, W), jnp.float32)
    skip = jax.random.normal(k_skip, (B, 3, H, W), jnp.float32)
    TOL = dict(rtol=1e-4, atol=1e-4)   # tight: reference mirrors kernel casts

    # block_id = 1 -> c = 8, ccc = 24: fused conv x2 + ReLU + render sum + skip
    blk1 = RenderBlockPallas(block_id=1, in_channels=Cin, key=k_p1)
    out1 = blk1(feature, h=H, w=W, bsize=B * H * W, skip=skip)
    jax.block_until_ready(out1)
    assert out1.shape == (B, 3, H, W)
    ref1 = _ref_forward(feature, blk1.params, 1, blk1.c, skip)
    assert jnp.allclose(out1, ref1, **TOL), float(jnp.max(jnp.abs(out1 - ref1)))

    # block_id = 0 -> single fused conv + ReLU, no skip
    blk0 = RenderBlockPallas(block_id=0, in_channels=Cin, key=k_p0)
    out0 = blk0(feature, h=H, w=W, bsize=B * H * W, skip=None)
    jax.block_until_ready(out0)
    assert out0.shape == (B, 3, H, W)
    ref0 = _ref_forward(feature, blk0.params, 0, blk0.c, None)
    assert jnp.allclose(out0, ref0, **TOL), float(jnp.max(jnp.abs(out0 - ref0)))

    # custom-render (unfused) path: conv-only kernel + plain-JAX render/skip
    blk1u = RenderBlockPallas(block_id=1, in_channels=Cin,
                              render=default_render, key=k_p1)
    out1u = blk1u(feature, h=H, w=W, bsize=B * H * W, skip=skip)
    jax.block_until_ready(out1u)
    assert jnp.allclose(out1u, ref1, **TOL), \
        float(jnp.max(jnp.abs(out1u - ref1)))

    # Larger single-batch case: exercises the in-kernel lane-chunk fori_loop
    # (tile_px = 4096 > CHUNK_COLS -> 2 sub-chunks) and the MIN_GRID_STEPS
    # grid split (grid = (1, 4)).
    Hb = Wb = 128
    feat_b = jax.random.normal(k_big, (1, Cin, Hb, Wb), jnp.float32)
    skip_b = jnp.zeros((1, 3, Hb, Wb), jnp.float32)
    outb = blk1(feat_b, h=Hb, w=Wb, bsize=Hb * Wb, skip=skip_b)
    jax.block_until_ready(outb)
    refb = _ref_forward(feat_b, blk1.params, 1, blk1.c, skip_b)
    assert jnp.allclose(outb, refb, **TOL), float(jnp.max(jnp.abs(outb - refb)))

    print("KERNEL_OK")
</pallas_src>

<mosaic_0001>
module attributes {stable_mosaic.version = 11 : i64} {
  func.func @kernel(%arg0: i32, %arg1: i32, %arg2: memref<1x4x128xf32, #tpu.memory_space<vmem>>, %arg3: memref<24x4xbf16, #tpu.memory_space<vmem>>, %arg4: memref<24x1xf32, #tpu.memory_space<vmem>>, %arg5: memref<24x24xbf16, #tpu.memory_space<vmem>>, %arg6: memref<24x1xf32, #tpu.memory_space<vmem>>, %arg7: memref<1x3x128xf32, #tpu.memory_space<vmem>>, %arg8: memref<1x3x128xf32, #tpu.memory_space<vmem>>) attributes {dimension_semantics = [#tpu.dimension_semantics<parallel>, #tpu.dimension_semantics<parallel>], iteration_bounds = array<i64: 2, 2>, scalar_prefetch = 0 : i64, scratch_operands = 0 : i64, tpu.core_type = #tpu.core_type<tc>, window_params = [{transform_indices = @transform_0, window_bounds = array<i64: 1, 4, 128>}, {pipeline_mode = #tpu.pipeline_mode<synchronous>, transform_indices = @transform_1, window_bounds = array<i64: 24, 4>}, {pipeline_mode = #tpu.pipeline_mode<synchronous>, transform_indices = @transform_2, window_bounds = array<i64: 24, 1>}, {pipeline_mode = #tpu.pipeline_mode<synchronous>, transform_indices = @transform_3, window_bounds = array<i64: 24, 24>}, {pipeline_mode = #tpu.pipeline_mode<synchronous>, transform_indices = @transform_4, window_bounds = array<i64: 24, 1>}, {transform_indices = @transform_5, window_bounds = array<i64: 1, 3, 128>}, {transform_indices = @transform_6, window_bounds = array<i64: 1, 3, 128>}]} {
    %c0 = arith.constant 0 : index
    %c0_0 = arith.constant 0 : index
    %0 = vector.load %arg3[%c0, %c0_0] : memref<24x4xbf16, #tpu.memory_space<vmem>>, vector<24x4xbf16>
    %c0_1 = arith.constant 0 : index
    %c0_2 = arith.constant 0 : index
    %1 = vector.load %arg4[%c0_1, %c0_2] : memref<24x1xf32, #tpu.memory_space<vmem>>, vector<24x1xf32>
    %c0_3 = arith.constant 0 : index
    %c0_4 = arith.constant 0 : index
    %2 = vector.load %arg5[%c0_3, %c0_4] : memref<24x24xbf16, #tpu.memory_space<vmem>>, vector<24x24xbf16>
    %c0_5 = arith.constant 0 : index
    %c0_6 = arith.constant 0 : index
    %3 = vector.load %arg6[%c0_5, %c0_6] : memref<24x1xf32, #tpu.memory_space<vmem>>, vector<24x1xf32>
    %c0_7 = arith.constant 0 : index
    %c0_8 = arith.constant 0 : index
    %c0_9 = arith.constant 0 : index
    %4 = vector.load %arg2[%c0_7, %c0_8, %c0_9] : memref<1x4x128xf32, #tpu.memory_space<vmem>>, vector<1x4x128xf32>
    %5 = vector.shape_cast %4 : vector<1x4x128xf32> to vector<4x128xf32>
    %6 = arith.truncf %5 : vector<4x128xf32> to vector<4x128xbf16>
    %cst = arith.constant dense<0.000000e+00> : vector<24x128xf32>
    %7 = tpu.matmul %0, %6, %cst {dimension_numbers = #tpu.dot_dimension_numbers<[1], [0], [0], [1], [0, 0, 1, 1], [], []>} : vector<24x4xbf16>, vector<4x128xbf16>, vector<24x128xf32> -> vector<24x128xf32>
    %8 = vector.broadcast %1 : vector<24x1xf32> to vector<24x128xf32>
    %9 = arith.addf %7, %8 : vector<24x128xf32>
    %cst_10 = arith.constant 0.000000e+00 : f32
    %10 = vector.broadcast %cst_10 : f32 to vector<24x128xf32>
    %11 = arith.maximumf %9, %10 : vector<24x128xf32>
    %12 = arith.truncf %11 : vector<24x128xf32> to vector<24x128xbf16>
    %cst_11 = arith.constant dense<0.000000e+00> : vector<24x128xf32>
    %13 = tpu.matmul %2, %12, %cst_11 {dimension_numbers = #tpu.dot_dimension_numbers<[1], [0], [0], [1], [0, 0, 1, 1], [], []>} : vector<24x24xbf16>, vector<24x128xbf16>, vector<24x128xf32> -> vector<24x128xf32>
    %14 = vector.broadcast %3 : vector<24x1xf32> to vector<24x128xf32>
    %15 = arith.addf %13, %14 : vector<24x128xf32>
    %cst_12 = arith.constant 0.000000e+00 : f32
    %16 = vector.broadcast %cst_12 : f32 to vector<24x128xf32>
    %17 = arith.maximumf %15, %16 : vector<24x128xf32>
    %18 = vector.shape_cast %17 : vector<24x128xf32> to vector<3x8x128xf32>
    %cst_13 = arith.constant dense<0.000000e+00> : vector<3x128xf32>
    %19 = vector.multi_reduction <add>, %18, %cst_13 [1] : vector<3x8x128xf32> to vector<3x128xf32>
    %c0_14 = arith.constant 0 : index
    %c0_15 = arith.constant 0 : index
    %c0_16 = arith.constant 0 : index
    %20 = vector.load %arg7[%c0_14, %c0_15, %c0_16] : memref<1x3x128xf32, #tpu.memory_space<vmem>>, vector<1x3x128xf32>
    %21 = vector.shape_cast %20 : vector<1x3x128xf32> to vector<3x128xf32>
    %22 = arith.addf %19, %21 : vector<3x128xf32>
    %c0_17 = arith.constant 0 : index
    %c0_18 = arith.constant 0 : index
    %c0_19 = arith.constant 0 : index
    %23 = vector.load %arg8[%c0_17, %c0_18, %c0_19] : memref<1x3x128xf32, #tpu.memory_space<vmem>>, vector<1x3x128xf32>
    %24 = vector.shape_cast %23 : vector<1x3x128xf32> to vector<3x128xf32>
    %25 = vector.shape_cast %22 : vector<3x128xf32> to vector<1x3x128xf32>
    tpu.vector_store %arg8[%c0_17, %c0_18, %c0_19], %25 {strides = array<i32>} : memref<1x3x128xf32, #tpu.memory_space<vmem>>, vector<1x3x128xf32>,
    return
  }
  func.func @transform_0(%arg0: i32, %arg1: i32) -> (i32, i32, i32) {
    %c0_i32 = arith.constant 0 : i32
    %c0_i32_0 = arith.constant 0 : i32
    return %arg0, %c0_i32, %arg1 : i32, i32, i32
  }
  func.func @transform_1(%arg0: i32, %arg1: i32) -> (i32, i32) {
    %c0_i32 = arith.constant 0 : i32
    %c0_i32_0 = arith.constant 0 : i32
    %c0_i32_1 = arith.constant 0 : i32
    return %c0_i32, %c0_i32_0 : i32, i32
  }
  func.func @transform_2(%arg0: i32, %arg1: i32) -> (i32, i32) {
    %c0_i32 = arith.constant 0 : i32
    %c0_i32_0 = arith.constant 0 : i32
    %c0_i32_1 = arith.constant 0 : i32
    return %c0_i32, %c0_i32_0 : i32, i32
  }
  func.func @transform_3(%arg0: i32, %arg1: i32) -> (i32, i32) {
    %c0_i32 = arith.constant 0 : i32
    %c0_i32_0 = arith.constant 0 : i32
    %c0_i32_1 = arith.constant 0 : i32
    return %c0_i32, %c0_i32_0 : i32, i32
  }
  func.func @transform_4(%arg0: i32, %arg1: i32) -> (i32, i32) {
    %c0_i32 = arith.constant 0 : i32
    %c0_i32_0 = arith.constant 0 : i32
    %c0_i32_1 = arith.constant 0 : i32
    return %c0_i32, %c0_i32_0 : i32, i32
  }
  func.func @transform_5(%arg0: i32, %arg1: i32) -> (i32, i32, i32) {
    %c0_i32 = arith.constant 0 : i32
    %c0_i32_0 = arith.constant 0 : i32
    return %arg0, %c0_i32, %arg1 : i32, i32, i32
  }
  func.func @transform_6(%arg0: i32, %arg1: i32) -> (i32, i32, i32) {
    %c0_i32 = arith.constant 0 : i32
    %c0_i32_0 = arith.constant 0 : i32
    return %arg0, %c0_i32, %arg1 : i32, i32, i32
  }
}

</mosaic_0001>

<llo_original>
// kernel: tpu_custom_call.1
$region0: #{tpu_custom_call.1}
  #allocation0 [shape = 'u32[]', space=smem, size = 0x4, offset = 0x4, fixed_abs, tag = 'smem constant byte address 0x4 - core index']
  #allocation1 [shape = 'u32[144,128]{1,0:T(1,128)}', space=vmem, size = 0x12000, scoped, tag = 'internal scratch']
  %s0 = inlined_call_operand.vmem [shape: f32[2,4,256], index: 0, kind: input, shape index: {}]
  %s1 = inlined_call_operand.vmem [shape: bf16[24,4], index: 1, kind: input, shape index: {}]
  %s2 = inlined_call_operand.vmem [shape: f32[24,1], index: 2, kind: input, shape index: {}]
  %s3 = inlined_call_operand.vmem [shape: bf16[24,24], index: 3, kind: input, shape index: {}]
  %s4 = inlined_call_operand.vmem [shape: f32[24,1], index: 4, kind: input, shape index: {}]
  %s5 = inlined_call_operand.vmem [shape: f32[2,3,256], index: 5, kind: input, shape index: {}]
  %s6 = inlined_call_operand.vmem [shape: f32[2,3,256], index: 6, kind: output, shape index: {}]
  %s7 = sld [smem:[#allocation0]]
  $region57: #{tpu_custom_call.1} parent=0
    _
  %s9 = ssub.s32 1, %s7
  %s10 = scalar_select 0, %s9, %s7
  loop: start=0, step=1, limit=6
  $region2: #{tpu_custom_call.1} parent=0 // loop_pre_header
    _
  $region3: #{tpu_custom_call.1} parent=0 // loop_header
    %s12 = sphi 0, %s16
    %p13 = scmp.ge.s32.totalorder %s12, 6
    %s19 = sphi 0, %s31
    %s20 = sphi 0, %s27
    %s21 = sphi 0, %s19
    %s22 = sphi 0, %s20
    %s23 = sphi 0, %s21
    %s24 = sphi 0, %s22
    %s36 = sphi 0, %s38
    %s39 = sphi 0, %s36
    %s40 = sphi 0, %s39
    %s56 = sphi 0, %s40
    %s60 = sphi 0, %s60
    %s62 = sphi 0, %s60
    %s63 = sphi 0, %s62
    %s77 = sphi 0, %s63
    %s81 = sphi 0, %s81
    %s83 = sphi 0, %s81
    %s84 = sphi 0, %s83
    %s98 = sphi 0, %s84
    %s102 = sphi 0, %s102
    %s104 = sphi 0, %s102
    %s105 = sphi 0, %s104
    %s119 = sphi 0, %s105
    %s123 = sphi 0, %s123
    %s125 = sphi 0, %s123
    %s126 = sphi 0, %s125
    %s140 = sphi 0, %s126
    %s148 = sphi 0, %s150
    %s151 = sphi 0, %s148
    %s152 = sphi 0, %s151
    %s168 = sphi 0, %s152
    %s176 = sphi 0, %s178
    %s179 = sphi 0, %s176
    %s180 = sphi 0, %s179
    %s196 = sphi 0, %s180
  $region4: #{tpu_custom_call.1} parent=0 // loop_header_branch
    %15 = sbr.rel (%p13) target = $region8
  $region5: #{tpu_custom_call.1} parent=0 // loop_body
    %s17 = ssub.s32 %s12, 1
    %s18 = ssub.s32 %s12, 2
    %s25 = sadd.s32 1, %s20
    %p26 = scmp.ge.s32.totalorder %s25, 2
    %s27 = scalar_select %p26, 0, %s25
    %s28 = sadd.s32 1, %s19
    %s29 = scalar_select %p26, %s28, %s19
    %p30 = scmp.ge.s32.totalorder %s29, 2
    %s31 = scalar_select %p30, 0, %s29
    %s32 = ssub.s32 %s19, %s31
    %s33 = ssub.s32 %s20, %s27
    %s34 = sor.u32 %s32, %s33
    %p35 = scmp.eq.s32.totalorder %s34, 0
    %s37 = sadd.s32 %s36, 1
    %s38 = scalar_select %p35, %s36, %s37
    %p41 = pneg %p35
    %p42 = scmp.eq.s32.totalorder %s12, 3
    %p43 = por %p41, %p42
    %p44 = scmp.ne.s32.totalorder %s36, %s39
    %p45 = scmp.eq.s32.totalorder %s12, 0
    %p46 = por %p44, %p45
    %p47 = scmp.ne.s32.totalorder %s36, %s39
    %p48 = scmp.eq.s32.totalorder %s17, 3
    %p49 = por %p47, %p48
    %p50 = scmp.ne.s32.totalorder %s39, %s40
    %p51 = scmp.eq.s32.totalorder %s17, 0
    %p52 = por %p50, %p51
    %p53 = scmp.ne.s32.totalorder %s39, %s40
    %p54 = scmp.eq.s32.totalorder %s18, 3
    %p55 = por %p53, %p54
    %p57 = scmp.ne.s32.totalorder %s40, %s56
    %p58 = scmp.eq.s32.totalorder %s18, 0
    %p59 = por %p57, %p58
    %s61 = sadd.s32 %s60, 1
    %p64 = scmp.eq.s32.totalorder %s12, 3
    %p65 = scmp.ne.s32.totalorder %s60, %s62
    %p66 = scmp.eq.s32.totalorder %s12, 0
    %p67 = por %p65, %p66
    %p68 = scmp.ne.s32.totalorder %s60, %s62
    %p69 = scmp.eq.s32.totalorder %s17, 3
    %p70 = por %p68, %p69
    %p71 = scmp.ne.s32.totalorder %s62, %s63
    %p72 = scmp.eq.s32.totalorder %s17, 0
    %p73 = por %p71, %p72
    %p74 = scmp.ne.s32.totalorder %s62, %s63
    %p75 = scmp.eq.s32.totalorder %s18, 3
    %p76 = por %p74, %p75
    %p78 = scmp.ne.s32.totalorder %s63, %s77
    %p79 = scmp.eq.s32.totalorder %s18, 0
    %p80 = por %p78, %p79
    %s82 = sadd.s32 %s81, 1
    %p85 = scmp.eq.s32.totalorder %s12, 3
    %p86 = scmp.ne.s32.totalorder %s81, %s83
    %p87 = scmp.eq.s32.totalorder %s12, 0
    %p88 = por %p86, %p87
    %p89 = scmp.ne.s32.totalorder %s81, %s83
    %p90 = scmp.eq.s32.totalorder %s17, 3
    %p91 = por %p89, %p90
    %p92 = scmp.ne.s32.totalorder %s83, %s84
    %p93 = scmp.eq.s32.totalorder %s17, 0
    %p94 = por %p92, %p93
    %p95 = scmp.ne.s32.totalorder %s83, %s84
    %p96 = scmp.eq.s32.totalorder %s18, 3
    %p97 = por %p95, %p96
    %p99 = scmp.ne.s32.totalorder %s84, %s98
    %p100 = scmp.eq.s32.totalorder %s18, 0
    %p101 = por %p99, %p100
    %s103 = sadd.s32 %s102, 1
    %p106 = scmp.eq.s32.totalorder %s12, 3
    %p107 = scmp.ne.s32.totalorder %s102, %s104
    %p108 = scmp.eq.s32.totalorder %s12, 0
    %p109 = por %p107, %p108
    %p110 = scmp.ne.s32.totalorder %s102, %s104
    %p111 = scmp.eq.s32.totalorder %s17, 3
    %p112 = por %p110, %p111
    %p113 = scmp.ne.s32.totalorder %s104, %s105
    %p114 = scmp.eq.s32.totalorder %s17, 0
    %p115 = por %p113, %p114
    %p116 = scmp.ne.s32.totalorder %s104, %s105
    %p117 = scmp.eq.s32.totalorder %s18, 3
    %p118 = por %p116, %p117
    %p120 = scmp.ne.s32.totalorder %s105, %s119
    %p121 = scmp.eq.s32.totalorder %s18, 0
    %p122 = por %p120, %p121
    %s124 = sadd.s32 %s123, 1
    %p127 = scmp.eq.s32.totalorder %s12, 3
    %p128 = scmp.ne.s32.totalorder %s123, %s125
    %p129 = scmp.eq.s32.totalorder %s12, 0
    %p130 = por %p128, %p129
    %p131 = scmp.ne.s32.totalorder %s123, %s125
    %p132 = scmp.eq.s32.totalorder %s17, 3
    %p133 = por %p131, %p132
    %p134 = scmp.ne.s32.totalorder %s125, %s126
    %p135 = scmp.eq.s32.totalorder %s17, 0
    %p136 = por %p134, %p135
    %p137 = scmp.ne.s32.totalorder %s125, %s126
    %p138 = scmp.eq.s32.totalorder %s18, 3
    %p139 = por %p137, %p138
    %p141 = scmp.ne.s32.totalorder %s126, %s140
    %p142 = scmp.eq.s32.totalorder %s18, 0
    %p143 = por %p141, %p142
    %s144 = ssub.s32 %s19, %s31
    %s145 = ssub.s32 %s20, %s27
    %s146 = sor.u32 %s144, %s145
    %p147 = scmp.eq.s32.totalorder %s146, 0
    %s149 = sadd.s32 %s148, 1
    %s150 = scalar_select %p147, %s148, %s149
    %p153 = pneg %p147
    %p154 = scmp.eq.s32.totalorder %s12, 3
    %p155 = por %p153, %p154
    %p156 = scmp.ne.s32.totalorder %s148, %s151
    %p157 = scmp.eq.s32.totalorder %s12, 0
    %p158 = por %p156, %p157
    %p159 = scmp.ne.s32.totalorder %s148, %s151
    %p160 = scmp.eq.s32.totalorder %s17, 3
    %p161 = por %p159, %p160
    %p162 = scmp.ne.s32.totalorder %s151, %s152
    %p163 = scmp.eq.s32.totalorder %s17, 0
    %p164 = por %p162, %p163
    %p165 = scmp.ne.s32.totalorder %s151, %s152
    %p166 = scmp.eq.s32.totalorder %s18, 3
    %p167 = por %p165, %p166
    %p169 = scmp.ne.s32.totalorder %s152, %s168
    %p170 = scmp.eq.s32.totalorder %s18, 0
    %p171 = por %p169, %p170
    %s172 = ssub.s32 %s19, %s31
    %s173 = ssub.s32 %s20, %s27
    %s174 = sor.u32 %s172, %s173
    %p175 = scmp.eq.s32.totalorder %s174, 0
    %s177 = sadd.s32 %s176, 1
    %s178 = scalar_select %p175, %s176, %s177
    %p181 = pneg %p175
    %p182 = scmp.eq.s32.totalorder %s12, 3
    %p183 = por %p181, %p182
    %p184 = scmp.ne.s32.totalorder %s176, %s179
    %p185 = scmp.eq.s32.totalorder %s12, 0
    %p186 = por %p184, %p185
    %p187 = scmp.ne.s32.totalorder %s176, %s179
    %p188 = scmp.eq.s32.totalorder %s17, 3
    %p189 = por %p187, %p188
    %p190 = scmp.ne.s32.totalorder %s179, %s180
    %p191 = scmp.eq.s32.totalorder %s17, 0
    %p192 = por %p190, %p191
    %p193 = scmp.ne.s32.totalorder %s179, %s180
    %p194 = scmp.eq.s32.totalorder %s18, 3
    %p195 = por %p193, %p194
    %p197 = scmp.ne.s32.totalorder %s180, %s196
    %p198 = scmp.eq.s32.totalorder %s18, 0
    %p199 = por %p197, %p198
    %p200 = scmp.le.s32.totalorder 1, %s12
    %p201 = scmp.lt.s32.totalorder %s12, 5
    %p202 = pnand %p200, %p201
    %p203 = pneg %p202
    // Predicated region
    $region9: #{tpu_custom_call.1} parent=5 // pred_check
      _
    $region10: #{tpu_custom_call.1} parent=5 // pred_check_branch
      %205 = sbr.rel (%p202) target = $region12
    $region11: #{tpu_custom_call.1} parent=5 // pred_region
      %s206 = ssub.s32 %s12, 1
      // Predicated region
      $region13: #{tpu_custom_call.1} parent=11 // pred_check
        %p207 = pneg %p73
      $region14: #{tpu_custom_call.1} parent=11 // pred_check_branch
        %209 = sbr.rel (%p207) target = $region16
      $region15: #{tpu_custom_call.1} parent=11 // pred_region
        _
      $region16: #{tpu_custom_call.1} parent=11 // pred_fallthru
        _
      // Predicated region
      $region17: #{tpu_custom_call.1} parent=11 // pred_check
        %p210 = pneg %p94
      $region18: #{tpu_custom_call.1} parent=11 // pred_check_branch
        %212 = sbr.rel (%p210) target = $region20
      $region19: #{tpu_custom_call.1} parent=11 // pred_region
        _
      $region20: #{tpu_custom_call.1} parent=11 // pred_fallthru
        _
      // Predicated region
      $region21: #{tpu_custom_call.1} parent=11 // pred_check
        %p213 = pneg %p115
      $region22: #{tpu_custom_call.1} parent=11 // pred_check_branch
        %215 = sbr.rel (%p213) target = $region24
      $region23: #{tpu_custom_call.1} parent=11 // pred_region
        _
      $region24: #{tpu_custom_call.1} parent=11 // pred_fallthru
        _
      // Predicated region
      $region25: #{tpu_custom_call.1} parent=11 // pred_check
        %p216 = pneg %p136
      $region26: #{tpu_custom_call.1} parent=11 // pred_check_branch
        %218 = sbr.rel (%p216) target = $region28
      $region27: #{tpu_custom_call.1} parent=11 // pred_region
        _
      $region28: #{tpu_custom_call.1} parent=11 // pred_fallthru
        _
    $region12: #{tpu_custom_call.1} parent=5 // pred_fallthru
      _
    %p219 = scmp.lt.s32.totalorder %s12, 4
    // Predicated region
    $region29: #{tpu_custom_call.1} parent=5 // pred_check
      %p220 = pneg %p219
    $region30: #{tpu_custom_call.1} parent=5 // pred_check_branch
      %222 = sbr.rel (%p220) target = $region32
    $region31: #{tpu_custom_call.1} parent=5 // pred_region
      // Predicated region
      $region33: #{tpu_custom_call.1} parent=31 // pred_check
        %p223 = pneg %p46
      $region34: #{tpu_custom_call.1} parent=31 // pred_check_branch
        %225 = sbr.rel (%p223) target = $region36
      $region35: #{tpu_custom_call.1} parent=31 // pred_region
        %p226 = scmp.lt.s32.totalorder %s19, 1
        %s227 = scalar_select %p226, %s19, 1
        %p228 = scmp.lt.s32.totalorder %s20, 1
        %s229 = scalar_select %p228, %s20, 1
        %s230 = smul.addr %s227, 2
        %s231 = sadd.s32 %s229, %s230
        %s232 = smul.addr %s231, 4
        %s233 = scalar_lea.vmem %s0, %s232
      $region36: #{tpu_custom_call.1} parent=31 // pred_fallthru
        _
      // Predicated region
      $region37: #{tpu_custom_call.1} parent=31 // pred_check
        %p234 = pneg %p158
      $region38: #{tpu_custom_call.1} parent=31 // pred_check_branch
        %236 = sbr.rel (%p234) target = $region40
      $region39: #{tpu_custom_call.1} parent=31 // pred_region
        %p237 = scmp.lt.s32.totalorder %s19, 1
        %s238 = scalar_select %p237, %s19, 1
        %p239 = scmp.lt.s32.totalorder %s20, 1
        %s240 = scalar_select %p239, %s20, 1
        %s241 = smul.addr %s238, 2
        %s242 = sadd.s32 %s240, %s241
        %s243 = smul.addr %s242, 4
        %s244 = scalar_lea.vmem %s5, %s243
      $region40: #{tpu_custom_call.1} parent=31 // pred_fallthru
        _
    $region32: #{tpu_custom_call.1} parent=5 // pred_fallthru
      _
    %p245 = scmp.le.s32.totalorder 1, %s12
    %p246 = scmp.lt.s32.totalorder %s12, 5
    %p247 = pnand %p245, %p246
    %p248 = pneg %p247
    // Predicated region
    $region41: #{tpu_custom_call.1} parent=5 // pred_check
      _
    $region42: #{tpu_custom_call.1} parent=5 // pred_check_branch
      %250 = sbr.rel (%p247) target = $region44
    $region43: #{tpu_custom_call.1} parent=5 // pred_region
      %s251 = ssub.s32 %s12, 1
      %p252 = scmp.lt.s32.totalorder %s21, 1
      %s253 = scalar_select %p252, %s21, 1
      %p254 = scmp.lt.s32.totalorder %s22, 1
      %s255 = scalar_select %p254, %s22, 1
      %s256 = smul.addr %s253, 2
      %s257 = sadd.s32 %s255, %s256
      %s258 = smul.addr %s257, 4
      %s259 = scalar_lea.vmem %s0, %s258
      %p260 = pneg %p52
      %p261 = pneg %p49
      %p262 = pneg %p73
      %p263 = pneg %p70
      %p264 = pneg %p94
      %p265 = pneg %p91
      %p266 = pneg %p115
      %p267 = pneg %p112
      %p268 = pneg %p136
      %p269 = pneg %p133
      %p270 = scmp.lt.s32.totalorder %s21, 1
      %s271 = scalar_select %p270, %s21, 1
      %p272 = scmp.lt.s32.totalorder %s22, 1
      %s273 = scalar_select %p272, %s22, 1
      %s274 = smul.addr %s271, 2
      %s275 = sadd.s32 %s273, %s274
      %s276 = smul.addr %s275, 4
      %s277 = scalar_lea.vmem %s5, %s276
      %p278 = pneg %p164
      %p279 = pneg %p161
      %p280 = pneg %p192
      %p281 = pneg %p189
      %p282 = scmp.lt.s32.totalorder %s21, 1
      %s283 = scalar_select %p282, %s21, 1
      %p284 = scmp.lt.s32.totalorder %s22, 1
      %s285 = scalar_select %p284, %s22, 1
      %s286 = smul.addr %s283, 2
      %s287 = sadd.s32 %s285, %s286
      %s288 = smul.addr %s287, 4
      %s289 = scalar_lea.vmem %s6, %s288
      %p290 = scmp.lt.s32.totalorder %s21, 1
      %s291 = scalar_select %p290, %s21, 1
      %p292 = scmp.lt.s32.totalorder %s22, 1
      %s293 = scalar_select %p292, %s22, 1
      %s294 = smul.addr %s291, 2
      %s295 = sadd.s32 %s293, %s294
      %s296 = smul.addr %s295, 4
      %s297 = scalar_lea.vmem %s0, %s296
      %p298 = scmp.lt.s32.totalorder %s21, 1
      %s299 = scalar_select %p298, %s21, 1
      %p300 = scmp.lt.s32.totalorder %s22, 1
      %s301 = scalar_select %p300, %s22, 1
      %s302 = smul.addr %s299, 2
      %s303 = sadd.s32 %s301, %s302
      %s304 = smul.addr %s303, 4
      %s305 = scalar_lea.vmem %s5, %s304
      %p306 = scmp.lt.s32.totalorder %s21, 1
      %s307 = scalar_select %p306, %s21, 1
      %p308 = scmp.lt.s32.totalorder %s22, 1
      %s309 = scalar_select %p308, %s22, 1
      %s310 = smul.addr %s307, 2
      %s311 = sadd.s32 %s309, %s310
      %s312 = smul.addr %s311, 4
      %s313 = scalar_lea.vmem %s6, %s312
      %v315 = vld [vmem:[%s1] sm:$0xf]
      %v316 = vld [vmem:[%s1 + $0x4] sm:$0xf]
      %v317 = vld [vmem:[%s1 + $0x8] sm:$0xf]
      %v318 = vld [vmem:[%s2] sm:$0xff]
      %v319 = vld [vmem:[%s2 + $0x8] sm:$0xff]
      %v320 = vld [vmem:[%s2 + $0x10] sm:$0xff]
      %v321 = vld [vmem:[%s3] sm:$0xf]
      %v322 = vld [vmem:[%s3 + $0x4] sm:$0xf]
      %v323 = vld [vmem:[%s3 + $0x8] sm:$0xf]
      %v324 = vld [vmem:[%s4] sm:$0xff]
      %v325 = vld [vmem:[%s4 + $0x8] sm:$0xff]
      %v326 = vld [vmem:[%s4 + $0x10] sm:$0xff]
      %v327 = vld [vmem:[%s297] sm:$0xf]
      %v328 = vpack.c.bf16 %v327, %v327
      %330 = vset.pattern.permute.xlu0 0
      %331 = vperm.xlu0 %330, %v318
      %v332 = vpop.permute.xlu0 %331
      %335 = vset.pattern.permute.xlu0 0
      %336 = vperm.xlu0 %335, %v319
      %v337 = vpop.permute.xlu0 %336
      %340 = vset.pattern.permute.xlu0 0
      %341 = vperm.xlu0 %340, %v320
      %v342 = vpop.permute.xlu0 %341
      %v347 = vunpack.c.l.b16 %v315
      %v348 = vunpack.c.l.b16 %v316
      %v349 = vunpack.c.l.b16 %v317
      %v350 = vpack.c.b16 %v348, %v347
      %v351 = vpack.c.b16 %v349, %v349
      %vm352 = vcmask 31744
      %v354 = vsel %vm352, %v350, 0
      %v357 = vsel %vm352, %v351, 0
      %vm359 = vcmask 1041408
      %v361 = vsel %vm359, %v328, 0
      %363 = vmatprep.subr.bf16.mxu0 0
      %364 = vmatpush1.bf16.msra.mxu0 %v361
      %365 = vmatprep.subr.bf16.mxu0 0
      %366 = vmatpush1.bf16.msra.mxu0 0
      %367 = vmatprep.subr.bf16.mxu0 0
      %368 = vmatpush1.bf16.msra.mxu0 0
      %369 = vmatprep.subr.bf16.mxu0 0
      %370 = vmatpush1.bf16.msra.mxu0 0
      %371 = vmatprep.subr.bf16.mxu0 0
      %372 = vmatpush1.bf16.msra.mxu0 0
      %373 = vmatprep.subr.bf16.mxu0 0
      %374 = vmatpush1.bf16.msra.mxu0 0
      %375 = vmatprep.subr.bf16.mxu0 0
      %376 = vmatpush1.bf16.msra.mxu0 0
      %377 = vmatprep.subr.bf16.mxu0 0
      %378 = vmatpush1.bf16.msra.mxu0 0
      %379 = vmatprep.subr.bf16.mxu0 0
      %380 = vmatpush1.bf16.msra.mxu0 0
      %381 = vmatprep.subr.bf16.mxu0 0
      %382 = vmatpush1.bf16.msra.mxu0 0
      %383 = vmatprep.subr.bf16.mxu0 0
      %384 = vmatpush1.bf16.msra.mxu0 0
      %385 = vmatprep.subr.bf16.mxu0 0
      %386 = vmatpush1.bf16.msra.mxu0 0
      %387 = vmatprep.subr.bf16.mxu0 0
      %388 = vmatpush1.bf16.msra.mxu0 0
      %389 = vmatprep.subr.bf16.mxu0 0
      %390 = vmatpush1.bf16.msra.mxu0 0
      %391 = vmatprep.subr.bf16.mxu0 0
      %392 = vmatpush1.bf16.msra.mxu0 0
      %393 = vmatprep.subr.bf16.mxu0 0
      %394 = vmatpush1.bf16.msra.mxu0 0
      %395 = vmatprep.mubr.bf16.mxu0 0
      %396 = vmatmul.mubr.bf16.gmra.mrb[0].mxu0 %v354
      %v397 = vpop.f32.mrb[0].mxu0
      %v398 = vadd.f32 %v332, %v397
      %v399 = vpop.f32.mrb[0].mxu0
      %v400 = vpop.f32.mrb[0].mxu0
      %v401 = vadd.f32 %v337, %v400
      %v402 = vpop.f32.mrb[0].mxu0
      %403 = vmatprep.mubr.bf16.mxu0 0
      %404 = vmatmul.mubr.bf16.gmra.mrb[0].mxu0 %v357
      %v405 = vpop.f32.mrb[0].mxu0
      %v406 = vadd.f32 %v342, %v405
      %v407 = vpop.f32.mrb[0].mxu0
      %v408 = vpop.f32.mrb[0].mxu0
      %v409 = vpop.f32.mrb[0].mxu0
      %410 = vdwg.mxu0
      %v411 = vmax.f32 %v398, 0.0
      %v412 = vmax.f32 %v401, 0.0
      %v413 = vmax.f32 %v406, 0.0
      %v414 = vpack.c.bf16 %v412, %v411
      %v415 = vpack.c.bf16 %v413, %v413
      %417 = vset.pattern.permute.xlu0 0
      %418 = vperm.xlu0 %417, %v324
      %v419 = vpop.permute.xlu0 %418
      %422 = vset.pattern.permute.xlu0 0
      %423 = vperm.xlu0 %422, %v325
      %v424 = vpop.permute.xlu0 %423
      %427 = vset.pattern.permute.xlu0 0
      %428 = vperm.xlu0 %427, %v326
      %v429 = vpop.permute.xlu0 %428
      %v434 = vunpack.c.l.b16 %v321
      %v435 = vunpack.c.l.b16 %v322
      %v436 = vunpack.c.l.b16 %v323
      %v437 = vpack.c.b16 %v435, %v434
      %v438 = vpack.c.b16 %v436, %v436
      %vm439 = vcmask 195584
      %v441 = vsel %vm439, %v437, 0
      %v444 = vsel %vm439, %v438, 0
      %vm446 = vcmask 1043456
      %v448 = vsel %vm446, %v415, 0
      %450 = vmatprep.subr.bf16.mxu0 0
      %451 = vmatpush1.bf16.msra.mxu0 %v414
      %452 = vmatprep.subr.bf16.mxu0 0
      %453 = vmatpush1.bf16.msra.mxu0 %v448
      %454 = vmatprep.subr.bf16.mxu0 0
      %455 = vmatpush1.bf16.msra.mxu0 0
      %456 = vmatprep.subr.bf16.mxu0 0
      %457 = vmatpush1.bf16.msra.mxu0 0
      %458 = vmatprep.subr.bf16.mxu0 0
      %459 = vmatpush1.bf16.msra.mxu0 0
      %460 = vmatprep.subr.bf16.mxu0 0
      %461 = vmatpush1.bf16.msra.mxu0 0
      %462 = vmatprep.subr.bf16.mxu0 0
      %463 = vmatpush1.bf16.msra.mxu0 0
      %464 = vmatprep.subr.bf16.mxu0 0
      %465 = vmatpush1.bf16.msra.mxu0 0
      %466 = vmatprep.subr.bf16.mxu0 0
      %467 = vmatpush1.bf16.msra.mxu0 0
      %468 = vmatprep.subr.bf16.mxu0 0
      %469 = vmatpush1.bf16.msra.mxu0 0
      %470 = vmatprep.subr.bf16.mxu0 0
      %471 = vmatpush1.bf16.msra.mxu0 0
      %472 = vmatprep.subr.bf16.mxu0 0
      %473 = vmatpush1.bf16.msra.mxu0 0
      %474 = vmatprep.subr.bf16.mxu0 0
      %475 = vmatpush1.bf16.msra.mxu0 0
      %476 = vmatprep.subr.bf16.mxu0 0
      %477 = vmatpush1.bf16.msra.mxu0 0
      %478 = vmatprep.subr.bf16.mxu0 0
      %479 = vmatpush1.bf16.msra.mxu0 0
      %480 = vmatprep.subr.bf16.mxu0 0
      %481 = vmatpush1.bf16.msra.mxu0 0
      %482 = vmatprep.mubr.bf16.mxu0 0
      %483 = vmatmul.mubr.bf16.gmra.mrb[0].mxu0 %v441
      %v484 = vpop.f32.mrb[0].mxu0
      %v485 = vadd.f32 %v419, %v484
      %v486 = vpop.f32.mrb[0].mxu0
      %v487 = vpop.f32.mrb[0].mxu0
      %v488 = vadd.f32 %v424, %v487
      %v489 = vpop.f32.mrb[0].mxu0
      %490 = vmatprep.mubr.bf16.mxu0 0
      %491 = vmatmul.mubr.bf16.gmra.mrb[0].mxu0 %v444
      %v492 = vpop.f32.mrb[0].mxu0
      %v493 = vadd.f32 %v429, %v492
      %v494 = vpop.f32.mrb[0].mxu0
      %v495 = vpop.f32.mrb[0].mxu0
      %v496 = vpop.f32.mrb[0].mxu0
      %497 = vdwg.mxu0
      %v498 = vmax.f32 %v485, 0.0
      %v499 = vmax.f32 %v488, 0.0
      %v500 = vmax.f32 %v493, 0.0
      %v501 = vrot.slane %v498, 4
      %v502 = vadd.f32 %v498, %v501
      %v503 = vrot.slane %v502, 2
      %v504 = vadd.f32 %v502, %v503
      %v505 = vrot.slane %v504, 1
      %v506 = vadd.f32 %v504, %v505
      %v507 = vrot.slane %v499, 4
      %v508 = vadd.f32 %v499, %v507
      %v509 = vrot.slane %v508, 2
      %v510 = vadd.f32 %v508, %v509
      %v511 = vrot.slane %v510, 1
      %v512 = vadd.f32 %v510, %v511
      %v513 = vrot.slane %v500, 4
      %v514 = vadd.f32 %v500, %v513
      %v515 = vrot.slane %v514, 2
      %v516 = vadd.f32 %v514, %v515
      %v517 = vrot.slane %v516, 1
      %v518 = vadd.f32 %v516, %v517
      %v519 = vld [vmem:[%s305] sm:$0x7]
      %v521 = vrot.slane %v519, 1
      %v522 = vrot.slane %v519, 2
      %v526 = vadd.f32 %v506, %v519
      %v527 = vadd.f32 %v512, %v521
      %v528 = vadd.f32 %v518, %v522
      %v532 = vrot.slane %v527, 7
      %vm533 = vcmask 1041409
      %v534 = vsel %vm533, %v532, %v526
      %v535 = vrot.slane %v528, 6
      %vm536 = vcmask 1042434
      %v537 = vsel %vm536, %v535, %v534
      %539 = vst [vmem:[%s313] sm:$0x7] %v537
      %p540 = scmp.lt.s32.totalorder %s21, 1
      %s541 = scalar_select %p540, %s21, 1
      %p542 = scmp.lt.s32.totalorder %s22, 1
      %s543 = scalar_select %p542, %s22, 1
      %s544 = smul.addr %s541, 2
      %s545 = sadd.s32 %s543, %s544
      %s546 = smul.addr %s545, 4
      %s547 = scalar_lea.vmem %s6, %s546
      // Predicated region
      $region45: #{tpu_custom_call.1} parent=43 // pred_check
        %p548 = pneg %p189
      $region46: #{tpu_custom_call.1} parent=43 // pred_check_branch
        %550 = sbr.rel (%p548) target = $region48
      $region47: #{tpu_custom_call.1} parent=43 // pred_region
        _
      $region48: #{tpu_custom_call.1} parent=43 // pred_fallthru
        _
    $region44: #{tpu_custom_call.1} parent=5 // pred_fallthru
      _
    %p551 = scmp.le.s32.totalorder 2, %s12
    // Predicated region
    $region49: #{tpu_custom_call.1} parent=5 // pred_check
      %p552 = pneg %p551
    $region50: #{tpu_custom_call.1} parent=5 // pred_check_branch
      %554 = sbr.rel (%p552) target = $region52
    $region51: #{tpu_custom_call.1} parent=5 // pred_region
      %s555 = ssub.s32 %s12, 2
      // Predicated region
      $region53: #{tpu_custom_call.1} parent=51 // pred_check
        %p556 = pneg %p195
      $region54: #{tpu_custom_call.1} parent=51 // pred_check_branch
        %558 = sbr.rel (%p556) target = $region56
      $region55: #{tpu_custom_call.1} parent=51 // pred_region
        %p559 = scmp.lt.s32.totalorder %s23, 1
        %s560 = scalar_select %p559, %s23, 1
        %p561 = scmp.lt.s32.totalorder %s24, 1
        %s562 = scalar_select %p561, %s24, 1
        %s563 = smul.addr %s560, 2
        %s564 = sadd.s32 %s562, %s563
        %s565 = smul.addr %s564, 4
        %s566 = scalar_lea.vmem %s6, %s565
      $region56: #{tpu_custom_call.1} parent=51 // pred_fallthru
        _
    $region52: #{tpu_custom_call.1} parent=5 // pred_fallthru
      _
  $region6: #{tpu_custom_call.1} parent=0 // loop_footer
    %s16 = sadd.s32 1, %s12
  $region7: #{tpu_custom_call.1} parent=0 // loop_footer_branch
    %11 = sbr.rel target = $region3
  $region8: #{tpu_custom_call.1} parent=0 // loop_exit
    _

</llo_original>
